<compile_context>
chip_gen: v6e
topology: v6e:2x2x1
jax: 0.10.0
libtpu: 0.0.40
codegen_flags: <defaults>
</compile_context>

<pallas_src>
import functools

import jax
import jax.numpy as jnp
from jax.experimental import pallas as pl
from jax.experimental.pallas import tpu as pltpu


def _fused_embed_kernel(idx_ref, table_ref, out_ref, *, v_offsets):
    # idx_ref:   [tile_n, K]            int32   (VMEM)
    # table_ref: [V_total, D_total]     float32 (VMEM, block-diagonal packed)
    # out_ref:   [tile_n, D_total]      float32 (VMEM)
    idx = idx_ref[...]                                   # [tile_n, K]
    tile_n = idx.shape[0]
    v_total = table_ref.shape[0]

    # Multi-hot over the packed vocab axis: each column's vocab range is
    # disjoint, so summing per-column one-hots is exact.
    lane = jax.lax.broadcasted_iota(jnp.int32, (tile_n, v_total), 1)
    hot = jnp.zeros((tile_n, v_total), dtype=table_ref.dtype)
    for k, off in enumerate(v_offsets):                  # K is small; unrolled
        hot += (lane == (idx[:, k:k + 1] + off)).astype(table_ref.dtype)

    # One MXU push produces the concatenated [tile_n, D_total] row block.
    out_ref[...] = jnp.dot(
        hot, table_ref[...], preferred_element_type=jnp.float32
    ).astype(out_ref.dtype)


def fused_embedding_lookup(x_idx, packed_table, v_offsets, *, tile_n=256):
    """x_idx: [N, K] int, packed_table: [V_total, D_total] f32 ->
    [N, D_total] f32 (concatenated per-column embeddings)."""
    n, k = x_idx.shape
    v_total, d_total = packed_table.shape

    # Batch tile: multiple of 8 sublanes, capped by tile_n, >= 8.
    tile_n = max(8, min(tile_n, pl.cdiv(n, 8) * 8))
    n_pad = pl.cdiv(n, tile_n) * tile_n

    idx = x_idx.astype(jnp.int32)
    if n_pad != n:
        # Pad with index 0 (always valid); padded rows are sliced off below.
        idx = jnp.pad(idx, ((0, n_pad - n), (0, 0)))

    kernel = functools.partial(_fused_embed_kernel, v_offsets=tuple(v_offsets))

    out = pl.pallas_call(
        kernel,
        out_shape=jax.ShapeDtypeStruct((n_pad, d_total), packed_table.dtype),
        grid=(n_pad // tile_n,),
        in_specs=[
            pl.BlockSpec((tile_n, k), lambda i: (i, 0)),          # indices tile
            pl.BlockSpec((v_total, d_total), lambda i: (0, 0)),   # table resident
        ],
        out_specs=pl.BlockSpec((tile_n, d_total), lambda i: (i, 0)),
        compiler_params=pltpu.CompilerParams(
            dimension_semantics=("parallel",),
        ),
        cost_estimate=pl.CostEstimate(
            flops=2 * n_pad * v_total * d_total,
            transcendentals=0,
            bytes_accessed=(idx.size * 4
                            + packed_table.size * 4
                            + n_pad * d_total * 4),
        ),
    )(idx, packed_table)

    if n_pad != n:
        out = out[:n]
    return out


class EmbeddingLayer:
    """JAX/Pallas port of the PyTorch `embedding_layer` module."""

    def __init__(self, dims, key):
        # dims: {col_index: (dim_in, dim_out)}
        self.dims = dict(dims)
        self.tables = {}
        for i, (dim_in, dim_out) in sorted(self.dims.items()):
            key, sub = jax.random.split(key)
            # nn.Embedding default init: weight ~ N(0, 1)
            self.tables[i] = jax.random.normal(
                sub, (dim_in, dim_out), dtype=jnp.float32
            )

        # Host-side one-time packing into a block-diagonal table so the kernel
        # can emit one matmul and one lane-dense output slab for all columns.
        self.cols = sorted(self.tables.keys())
        self.v_offsets = []
        self.d_offsets = []
        v_off = d_off = 0
        for i in self.cols:
            v_i, d_i = self.tables[i].shape
            self.v_offsets.append(v_off)
            self.d_offsets.append(d_off)
            v_off += v_i
            d_off += d_i
        self.v_total, self.d_total = v_off, d_off

        packed = jnp.zeros((self.v_total, self.d_total), dtype=jnp.float32)
        for i, vo, do in zip(self.cols, self.v_offsets, self.d_offsets):
            v_i, d_i = self.tables[i].shape
            packed = packed.at[vo:vo + v_i, do:do + d_i].set(self.tables[i])
        self.packed_table = packed

    def __call__(self, x, rev=False):
        if rev:
            return None  # PyTorch forward does `pass` for rev=True
        num_cols = x.shape[1]
        for i in range(num_cols):
            if i not in self.tables:
                # TODO(synk): passthrough column would break torch.cat(dim=1)
                # in the reference module (1-D vs 2-D); not supported here.
                raise ValueError(f"column {i} has no embedding table")
        # Columns must be in kernel packing order 0..K-1.
        x_ordered = x[:, jnp.array(self.cols, dtype=jnp.int32)] \
            if self.cols != list(range(num_cols)) else x
        return fused_embedding_lookup(
            x_ordered, self.packed_table, self.v_offsets
        )

    def jacobian(self, x, rev=False):
        return 0


if __name__ == "__main__":
    key = jax.random.PRNGKey(0)
    k_params, k_idx0, k_idx1 = jax.random.split(key, 3)

    # Two embedded columns: col 0 -> vocab 16, dim 8 ; col 1 -> vocab 32, dim 16
    dims = {0: (16, 8), 1: (32, 16)}
    layer = EmbeddingLayer(dims, k_params)

    batch = 40  # not a multiple of the batch tile -> exercises padding path
    col0 = jax.random.randint(k_idx0, (batch, 1), 0, 16, dtype=jnp.int32)
    col1 = jax.random.randint(k_idx1, (batch, 1), 0, 32, dtype=jnp.int32)
    x = jnp.concatenate([col0, col1], axis=1)  # [batch, 2] int32

    out = layer(x)
    out = jax.block_until_ready(out)

    # Pure-JAX reference check (plain gather + concat)
    ref = jnp.concatenate(
        [layer.tables[0][x[:, 0]], layer.tables[1][x[:, 1]]], axis=1
    )
    assert out.shape == (batch, 8 + 16), out.shape
    assert jnp.allclose(out, ref, atol=1e-5), "mismatch vs reference"

    print("KERNEL_OK")
</pallas_src>

<mosaic_0001>
module attributes {stable_mosaic.version = 11 : i64} {
  func.func @_fused_embed_kernel(%arg0: i32, %arg1: memref<40x2xi32, #tpu.memory_space<vmem>>, %arg2: memref<48x24xf32, #tpu.memory_space<vmem>>, %arg3: memref<40x24xf32, #tpu.memory_space<vmem>>) attributes {dimension_semantics = [#tpu.dimension_semantics<parallel>], iteration_bounds = array<i64: 1>, scalar_prefetch = 0 : i64, scratch_operands = 0 : i64, tpu.core_type = #tpu.core_type<tc>, window_params = [{transform_indices = @transform_0, window_bounds = array<i64: 40, 2>}, {pipeline_mode = #tpu.pipeline_mode<synchronous>, transform_indices = @transform_1, window_bounds = array<i64: 48, 24>}, {transform_indices = @transform_2, window_bounds = array<i64: 40, 24>}]} {
    %c0 = arith.constant 0 : index
    %c0_0 = arith.constant 0 : index
    %0 = vector.load %arg1[%c0, %c0_0] : memref<40x2xi32, #tpu.memory_space<vmem>>, vector<40x2xi32>
    %1 = tpu.iota {dimensions = array<i32: 1>} : vector<40x48xi32>
    %cst = arith.constant 0.000000e+00 : f32
    %2 = vector.broadcast %cst : f32 to vector<40x48xf32>
    %3 = vector.extract_strided_slice %0 {offsets = [0, 0], sizes = [40, 1], strides = [1, 1]} : vector<40x2xi32> to vector<40x1xi32>
    %c0_i32 = arith.constant 0 : i32
    %4 = vector.broadcast %c0_i32 : i32 to vector<40x1xi32>
    %5 = arith.addi %3, %4 : vector<40x1xi32>
    %6 = vector.broadcast %5 : vector<40x1xi32> to vector<40x48xi32>
    %7 = arith.cmpi eq, %1, %6 : vector<40x48xi32>
    %8 = arith.extui %7 : vector<40x48xi1> to vector<40x48xi32>
    %9 = arith.sitofp %8 : vector<40x48xi32> to vector<40x48xf32>
    %10 = arith.addf %2, %9 : vector<40x48xf32>
    %11 = vector.extract_strided_slice %0 {offsets = [0, 1], sizes = [40, 1], strides = [1, 1]} : vector<40x2xi32> to vector<40x1xi32>
    %c16_i32 = arith.constant 16 : i32
    %12 = vector.broadcast %c16_i32 : i32 to vector<40x1xi32>
    %13 = arith.addi %11, %12 : vector<40x1xi32>
    %14 = vector.broadcast %13 : vector<40x1xi32> to vector<40x48xi32>
    %15 = arith.cmpi eq, %1, %14 : vector<40x48xi32>
    %16 = arith.extui %15 : vector<40x48xi1> to vector<40x48xi32>
    %17 = arith.sitofp %16 : vector<40x48xi32> to vector<40x48xf32>
    %18 = arith.addf %10, %17 : vector<40x48xf32>
    %c0_1 = arith.constant 0 : index
    %c0_2 = arith.constant 0 : index
    %19 = vector.load %arg2[%c0_1, %c0_2] : memref<48x24xf32, #tpu.memory_space<vmem>>, vector<48x24xf32>
    %cst_3 = arith.constant dense<0.000000e+00> : vector<40x24xf32>
    %20 = tpu.matmul %18, %19, %cst_3 {dimension_numbers = #tpu.dot_dimension_numbers<[1], [0], [0], [1], [0, 0, 1, 1], [], []>} : vector<40x48xf32>, vector<48x24xf32>, vector<40x24xf32> -> vector<40x24xf32>
    %c0_4 = arith.constant 0 : index
    %c0_5 = arith.constant 0 : index
    %21 = vector.load %arg3[%c0_4, %c0_5] : memref<40x24xf32, #tpu.memory_space<vmem>>, vector<40x24xf32>
    tpu.vector_store %arg3[%c0_4, %c0_5], %20 {strides = array<i32>} : memref<40x24xf32, #tpu.memory_space<vmem>>, vector<40x24xf32>,
    return
  }
  func.func @transform_0(%arg0: i32) -> (i32, i32) {
    %c0_i32 = arith.constant 0 : i32
    %c0_i32_0 = arith.constant 0 : i32
    return %arg0, %c0_i32 : i32, i32
  }
  func.func @transform_1(%arg0: i32) -> (i32, i32) {
    %c0_i32 = arith.constant 0 : i32
    %c0_i32_0 = arith.constant 0 : i32
    %c0_i32_1 = arith.constant 0 : i32
    return %c0_i32, %c0_i32_0 : i32, i32
  }
  func.func @transform_2(%arg0: i32) -> (i32, i32) {
    %c0_i32 = arith.constant 0 : i32
    %c0_i32_0 = arith.constant 0 : i32
    return %arg0, %c0_i32 : i32, i32
  }
}

</mosaic_0001>

<llo_original>
// kernel: tpu_custom_call.1
$region0: #{tpu_custom_call.1}
  #allocation0 [shape = 'u32[]', space=smem, size = 0x4, offset = 0x4, fixed_abs, tag = 'smem constant byte address 0x4 - core index']
  #allocation1 [shape = 'u32[144,128]{1,0:T(1,128)}', space=vmem, size = 0x12000, scoped, tag = 'internal scratch']
  %s0 = inlined_call_operand.vmem [shape: s32[40,2], index: 0, kind: input, shape index: {}]
  %s1 = inlined_call_operand.vmem [shape: f32[48,24], index: 1, kind: input, shape index: {}]
  %s2 = inlined_call_operand.vmem [shape: f32[40,24], index: 2, kind: output, shape index: {}]
  %s3 = sld [smem:[#allocation0]]
  $region18: #{tpu_custom_call.1} parent=0
    _
  %s5 = ssub.s32 1, %s3
  %s6 = scalar_select 0, %s5, %s3
  // Predicated region
  $region2: #{tpu_custom_call.1} parent=0 // pred_check
    _
  $region3: #{tpu_custom_call.1} parent=0 // pred_check_branch
    %8 = sbr.rel (0) target = $region5
  $region4: #{tpu_custom_call.1} parent=0 // pred_region
    _
  $region5: #{tpu_custom_call.1} parent=0 // pred_fallthru
    _
  // Predicated region
  $region6: #{tpu_custom_call.1} parent=0 // pred_check
    _
  $region7: #{tpu_custom_call.1} parent=0 // pred_check_branch
    %10 = sbr.rel (0) target = $region9
  $region8: #{tpu_custom_call.1} parent=0 // pred_region
    _
  $region9: #{tpu_custom_call.1} parent=0 // pred_fallthru
    _
  %v11 = vld [vmem:[%s0] sm:$0xff]
  %v12 = vld [vmem:[%s0 + $0x8] sm:$0xff]
  %v13 = vld [vmem:[%s0 + $0x10] sm:$0xff]
  %v14 = vld [vmem:[%s0 + $0x18] sm:$0xff]
  %v15 = vld [vmem:[%s0 + $0x20] sm:$0xff]
  %v16 = vlaneseq
  %v17 = vand.u32 %v16, 127
  %18 = vset.pattern.permute.xlu0 0
  %19 = vperm.xlu0 %18, %v11
  %v20 = vpop.permute.xlu0 %19
  %21 = vset.pattern.permute.xlu0 0
  %22 = vperm.xlu0 %21, %v12
  %v23 = vpop.permute.xlu0 %22
  %24 = vset.pattern.permute.xlu0 0
  %25 = vperm.xlu0 %24, %v13
  %v26 = vpop.permute.xlu0 %25
  %27 = vset.pattern.permute.xlu0 0
  %28 = vperm.xlu0 %27, %v14
  %v29 = vpop.permute.xlu0 %28
  %30 = vset.pattern.permute.xlu0 0
  %31 = vperm.xlu0 %30, %v15
  %v32 = vpop.permute.xlu0 %31
  %vm33 = vcmp.eq.s32.totalorder %v17, %v20
  %vm34 = vcmp.eq.s32.totalorder %v17, %v23
  %vm35 = vcmp.eq.s32.totalorder %v17, %v26
  %vm36 = vcmp.eq.s32.totalorder %v17, %v29
  %vm37 = vcmp.eq.s32.totalorder %v17, %v32
  %v38 = vsel %vm33, 1, 0
  %v39 = vsel %vm34, 1, 0
  %v40 = vsel %vm35, 1, 0
  %v41 = vsel %vm36, 1, 0
  %v42 = vsel %vm37, 1, 0
  %v43 = vcvt.s32.f32 %v38
  %v44 = vcvt.s32.f32 %v39
  %v45 = vcvt.s32.f32 %v40
  %v46 = vcvt.s32.f32 %v41
  %v47 = vcvt.s32.f32 %v42
  %v48 = vadd.f32 %v43, 0.0
  %v49 = vadd.f32 %v44, 0.0
  %v50 = vadd.f32 %v45, 0.0
  %v51 = vadd.f32 %v46, 0.0
  %v52 = vadd.f32 %v47, 0.0
  %v53 = vadd.s32 %v11, 16
  %v54 = vadd.s32 %v12, 16
  %v55 = vadd.s32 %v13, 16
  %v56 = vadd.s32 %v14, 16
  %v57 = vadd.s32 %v15, 16
  %58 = vset.pattern.permute.xlu0 1
  %59 = vperm.xlu0 %58, %v53
  %v60 = vpop.permute.xlu0 %59
  %61 = vset.pattern.permute.xlu0 1
  %62 = vperm.xlu0 %61, %v54
  %v63 = vpop.permute.xlu0 %62
  %64 = vset.pattern.permute.xlu0 1
  %65 = vperm.xlu0 %64, %v55
  %v66 = vpop.permute.xlu0 %65
  %67 = vset.pattern.permute.xlu0 1
  %68 = vperm.xlu0 %67, %v56
  %v69 = vpop.permute.xlu0 %68
  %70 = vset.pattern.permute.xlu0 1
  %71 = vperm.xlu0 %70, %v57
  %v72 = vpop.permute.xlu0 %71
  %vm73 = vcmp.eq.s32.totalorder %v17, %v60
  %vm74 = vcmp.eq.s32.totalorder %v17, %v63
  %vm75 = vcmp.eq.s32.totalorder %v17, %v66
  %vm76 = vcmp.eq.s32.totalorder %v17, %v69
  %vm77 = vcmp.eq.s32.totalorder %v17, %v72
  %v78 = vsel %vm73, 1, 0
  %v79 = vsel %vm74, 1, 0
  %v80 = vsel %vm75, 1, 0
  %v81 = vsel %vm76, 1, 0
  %v82 = vsel %vm77, 1, 0
  %v83 = vcvt.s32.f32 %v78
  %v84 = vcvt.s32.f32 %v79
  %v85 = vcvt.s32.f32 %v80
  %v86 = vcvt.s32.f32 %v81
  %v87 = vcvt.s32.f32 %v82
  %v88 = vadd.f32 %v48, %v83
  %v89 = vadd.f32 %v49, %v84
  %v90 = vadd.f32 %v50, %v85
  %v91 = vadd.f32 %v51, %v86
  %v92 = vadd.f32 %v52, %v87
  %v93 = vld [vmem:[%s1] sm:$0xff]
  %v94 = vld [vmem:[%s1 + $0x8] sm:$0xff]
  %v95 = vld [vmem:[%s1 + $0x10] sm:$0xff]
  %v96 = vld [vmem:[%s1 + $0x18] sm:$0xff]
  %v97 = vld [vmem:[%s1 + $0x20] sm:$0xff]
  %v98 = vld [vmem:[%s1 + $0x28] sm:$0xff]
  %vm99 = vcmask 392192
  %v101 = vsel %vm99, %v88, 0
  %v104 = vsel %vm99, %v89, 0
  %v107 = vsel %vm99, %v90, 0
  %v110 = vsel %vm99, %v91, 0
  %v113 = vsel %vm99, %v92, 0
  %115 = vmatprep.subr.mxu0 0.0
  %116 = vmatpush1.msra.mxu0 0.0
  %117 = vmatprep.subr.mxu0 0.0
  %118 = vmatpush1.msra.mxu0 0.0
  %119 = vmatprep.subr.mxu0 0.0
  %120 = vmatpush1.msra.mxu0 0.0
  %121 = vmatprep.subr.mxu0 0.0
  %122 = vmatpush1.msra.mxu0 0.0
  %123 = vmatprep.subr.mxu0 0.0
  %124 = vmatpush1.msra.mxu0 0.0
  %125 = vmatprep.subr.mxu0 0.0
  %126 = vmatpush1.msra.mxu0 0.0
  %127 = vmatprep.subr.mxu0 0.0
  %128 = vmatpush1.msra.mxu0 0.0
  %129 = vmatprep.subr.mxu0 0.0
  %130 = vmatpush1.msra.mxu0 0.0
  %131 = vmatprep.subr.mxu0 0.0
  %132 = vmatpush1.msra.mxu0 0.0
  %133 = vmatprep.subr.mxu0 0.0
  %134 = vmatpush1.msra.mxu0 0.0
  %135 = vmatprep.subr.mxu0 0.0
  %136 = vmatpush1.msra.mxu0 %v98
  %137 = vmatprep.subr.mxu0 0.0
  %138 = vmatpush1.msra.mxu0 %v97
  %139 = vmatprep.subr.mxu0 0.0
  %140 = vmatpush1.msra.mxu0 %v96
  %141 = vmatprep.subr.mxu0 0.0
  %142 = vmatpush1.msra.mxu0 %v95
  %143 = vmatprep.subr.mxu0 0.0
  %144 = vmatpush1.msra.mxu0 %v94
  %145 = vmatprep.subr.mxu0 0.0
  %146 = vmatpush1.msra.mxu0 %v93
  %147 = vmatprep.subr.mxu0 0.0
  %148 = vmatpush2.msra.mxu0 0.0
  %149 = vmatprep.subr.mxu0 0.0
  %150 = vmatpush2.msra.mxu0 0.0
  %151 = vmatprep.subr.mxu0 0.0
  %152 = vmatpush2.msra.mxu0 0.0
  %153 = vmatprep.subr.mxu0 0.0
  %154 = vmatpush2.msra.mxu0 0.0
  %155 = vmatprep.subr.mxu0 0.0
  %156 = vmatpush2.msra.mxu0 0.0
  %157 = vmatprep.subr.mxu0 0.0
  %158 = vmatpush2.msra.mxu0 0.0
  %159 = vmatprep.subr.mxu0 0.0
  %160 = vmatpush2.msra.mxu0 0.0
  %161 = vmatprep.subr.mxu0 0.0
  %162 = vmatpush2.msra.mxu0 0.0
  %163 = vmatprep.subr.mxu0 0.0
  %164 = vmatpush2.msra.mxu0 0.0
  %165 = vmatprep.subr.mxu0 0.0
  %166 = vmatpush2.msra.mxu0 0.0
  %167 = vmatprep.subr.mxu0 0.0
  %168 = vmatpush2.msra.mxu0 0.0
  %169 = vmatprep.subr.mxu0 0.0
  %170 = vmatpush2.msra.mxu0 0.0
  %171 = vmatprep.subr.mxu0 0.0
  %172 = vmatpush2.msra.mxu0 0.0
  %173 = vmatprep.subr.mxu0 0.0
  %174 = vmatpush2.msra.mxu0 0.0
  %175 = vmatprep.subr.mxu0 0.0
  %176 = vmatpush2.msra.mxu0 0.0
  %177 = vmatprep.subr.mxu0 0.0
  %178 = vmatpush2.msra.mxu0 0.0
  %179 = vmatprep.mubr.f32.mxu0 0.0
  %180 = vmatmul.mubr.f32.gmra.mxu0 %v101
  %v181 = vpop.f32.mrf.mxu0
  %v182 = vadd.f32 0.0, %v181
  %v183 = vpop.f32.mrf.mxu0
  %184 = vmatprep.mubr.f32.mxu0 0.0
  %185 = vmatmul.mubr.f32.gmra.mxu0 %v104
  %v186 = vpop.f32.mrf.mxu0
  %v187 = vadd.f32 0.0, %v186
  %v188 = vpop.f32.mrf.mxu0
  %189 = vmatprep.mubr.f32.mxu0 0.0
  %190 = vmatmul.mubr.f32.gmra.mxu0 %v107
  %v191 = vpop.f32.mrf.mxu0
  %v192 = vadd.f32 0.0, %v191
  %v193 = vpop.f32.mrf.mxu0
  %194 = vmatprep.mubr.f32.mxu0 0.0
  %195 = vmatmul.mubr.f32.gmra.mxu0 %v110
  %v196 = vpop.f32.mrf.mxu0
  %v197 = vadd.f32 0.0, %v196
  %v198 = vpop.f32.mrf.mxu0
  %199 = vmatprep.mubr.f32.mxu0 0.0
  %200 = vmatmul.mubr.f32.gmra.mxu0 %v113
  %v201 = vpop.f32.mrf.mxu0
  %v202 = vadd.f32 0.0, %v201
  %v203 = vpop.f32.mrf.mxu0
  %204 = vdwg.mxu0
  %vm205 = vcmask 195584
  %206 = vst.msk [vmem:[%s2] sm:$0xff] %vm205, %v182
  %207 = vst.msk [vmem:[%s2 + $0x8] sm:$0xff] %vm205, %v187
  %208 = vst.msk [vmem:[%s2 + $0x10] sm:$0xff] %vm205, %v192
  %209 = vst.msk [vmem:[%s2 + $0x18] sm:$0xff] %vm205, %v197
  %210 = vst.msk [vmem:[%s2 + $0x20] sm:$0xff] %vm205, %v202
  // Predicated region
  $region10: #{tpu_custom_call.1} parent=0 // pred_check
    _
  $region11: #{tpu_custom_call.1} parent=0 // pred_check_branch
    %212 = sbr.rel (0) target = $region13
  $region12: #{tpu_custom_call.1} parent=0 // pred_region
    _
  $region13: #{tpu_custom_call.1} parent=0 // pred_fallthru
    _
  // Predicated region
  $region14: #{tpu_custom_call.1} parent=0 // pred_check
    _
  $region15: #{tpu_custom_call.1} parent=0 // pred_check_branch
    %214 = sbr.rel (0) target = $region17
  $region16: #{tpu_custom_call.1} parent=0 // pred_region
    _
  $region17: #{tpu_custom_call.1} parent=0 // pred_fallthru
    _

</llo_original>
